<compile_context>
chip_gen: v6e
topology: v6e:2x2x1
jax: 0.10.0
libtpu: 0.0.40
codegen_flags: <defaults>
</compile_context>

<pallas_src>
import math
import functools

import jax
import jax.numpy as jnp
from jax import lax
from jax.experimental import pallas as pl
from jax.experimental.pallas import tpu as pltpu

_NEG_BIG = -1e30      # additive user-mask bias (finite: fully-masked row -> uniform attn, no NaN)
_BLOCK_FILL = -3e38   # structural off-block fill: exp(fill - rowmax) underflows to exactly 0


def _idiv(x, d):
    """x // d for non-negative int32 vectors; shift when d is a power of two."""
    if d & (d - 1) == 0:
        return x >> int(math.log2(d))
    return x // d


def _imod(x, d):
    """x % d for non-negative int32 vectors; bitmask when d is a power of two."""
    if d & (d - 1) == 0:
        return x & (d - 1)
    return x % d


def _onehot_f32(cond):
    return jnp.where(cond, jnp.float32(1.0), jnp.float32(0.0))


def _cross_attn_kernel(*refs, scale, B, L, S, H, mix, has_mask):
    if has_mask:
        q_ref, k_ref, v_ref, m_ref, o_ref = refs
    else:
        q_ref, k_ref, v_ref, o_ref = refs
        m_ref = None

    R = B * L * H      # fused Q rows, ordered (b, l, h)
    C = B * S * H      # fused K/V rows, ordered (b, s, h)

    q = q_ref[...]     # (R, E)   native dtype
    k = k_ref[...]     # (C, E)
    v = v_ref[...]     # (C, Dv)

    # Fold the softmax scale into Q (R*E elements) instead of the R*C scores.
    qs = q * jnp.asarray(scale, dtype=q.dtype)

    # One fused QK^T for every (batch, head): contract E directly (no k.T copy),
    # f32 accumulation on the MXU.
    s = lax.dot_general(qs, k, (((1,), (1,)), ((), ())),
                        preferred_element_type=jnp.float32)            # (R, C) f32

    # Optional user mask (L, S), nonzero = masked.  Convert to an additive bias
    # in-kernel and expand to the fused layout with two one-hot matmuls:
    #   row r -> l = (r // H) % L,   col c -> s = (c // H) % S.
    if has_mask:
        bias_ls = jnp.where(m_ref[...] != 0, jnp.float32(_NEG_BIG),
                            jnp.float32(0.0))                           # (L, S)
        rr = lax.broadcasted_iota(jnp.int32, (R, L), 0)
        ll = lax.broadcasted_iota(jnp.int32, (R, L), 1)
        row_sel = _onehot_f32(_imod(_idiv(rr, H), L) == ll)             # (R, L)
        ss = lax.broadcasted_iota(jnp.int32, (S, C), 0)
        cc = lax.broadcasted_iota(jnp.int32, (S, C), 1)
        col_sel = _onehot_f32(ss == _imod(_idiv(cc, H), S))             # (S, C)
        bias_lc = lax.dot_general(bias_ls, col_sel, (((1,), (0,)), ((), ())),
                                  preferred_element_type=jnp.float32)   # (L, C)
        s = s + lax.dot_general(row_sel, bias_lc, (((1,), (0,)), ((), ())),
                                preferred_element_type=jnp.float32)     # (R, C)

    # Block-diagonal structural mask: row (b, l, h) only attends to columns with
    # the same (b, h).  Off-block entries exp() to exactly 0 after the softmax.
    r_ids = lax.broadcasted_iota(jnp.int32, (R, C), 0)
    c_ids = lax.broadcasted_iota(jnp.int32, (R, C), 1)
    same = jnp.logical_and(_idiv(r_ids, L * H) == _idiv(c_ids, S * H),
                           _imod(r_ids, H) == _imod(c_ids, H))
    s = jnp.where(same, s, jnp.float32(_BLOCK_FILL))

    # One numerically-stable softmax pass over the fused key axis.
    s_max = jnp.max(s, axis=-1, keepdims=True)                          # (R, 1)
    p = jnp.exp(s - s_max)                                              # off-block -> 0
    denom = jnp.sum(p, axis=-1, keepdims=True)                          # (R, 1)

    # One fused PV matmul; exact normalization folded into the small output.
    o = lax.dot_general(p.astype(v.dtype), v, (((1,), (0,)), ((), ())),
                        preferred_element_type=jnp.float32)             # (R, Dv)
    o = o / denom

    if mix:
        # PyTorch mix=True flattens in (b, h, l, d) order; reorder rows from
        # (b, l, h) to (b, h, l) with a one-hot permutation matmul so the output
        # is still written with a single contiguous store.
        rp = lax.broadcasted_iota(jnp.int32, (R, R), 0)   # destination rows (b, h, l)
        rs = lax.broadcasted_iota(jnp.int32, (R, R), 1)   # source rows      (b, l, h)
        b_d = _idiv(rp, H * L)
        h_d = _imod(_idiv(rp, L), H)
        l_d = _imod(rp, L)
        perm = _onehot_f32(rs == (b_d * (L * H) + l_d * H + h_d))        # (R, R)
        o = lax.dot_general(perm, o, (((1,), (0,)), ((), ())),
                            preferred_element_type=jnp.float32)

    o_ref[...] = o.astype(o_ref.dtype)                                   # single store


def cross_attention(queries, keys, values, mask=None, *, n_heads, mix=True):
    """Pallas implementation of CrossAttention.forward (eval mode).

    queries: (B, L, d_model), keys: (B, S, d_model), values: (B, S, d_model)
    mask:    optional (L, S) boolean / integer; nonzero (True) = masked out.
    returns: (B, L, d_model)
    """
    B, L, d_model = queries.shape
    _, S, _ = keys.shape
    H = n_heads
    E = d_model // H
    Dv = d_model // H
    scale = 1.0 / math.sqrt(E)
    R = B * L * H
    C = B * S * H

    # Free row-major reshapes only (no HBM transposes): rows ordered (b, l, h)
    # for Q and (b, s, h) for K/V, features last.
    q2 = queries.reshape(R, E)
    k2 = keys.reshape(C, E)
    v2 = values.reshape(C, Dv)

    has_mask = mask is not None
    args = [q2, k2, v2]
    in_specs = [
        pl.BlockSpec((R, E), lambda i: (0, 0)),
        pl.BlockSpec((C, E), lambda i: (0, 0)),
        pl.BlockSpec((C, Dv), lambda i: (0, 0)),
    ]
    if has_mask:
        # Raw integer mask; the -1e30 bias is built in-kernel (no f32 bias
        # materialization / extra HBM round-trip in the wrapper).  int32 keeps
        # the tiny (L, S) block layout trivial; total traffic is L*S*4 bytes.
        args.append(jnp.asarray(mask).astype(jnp.int32))
        in_specs.append(pl.BlockSpec((L, S), lambda i: (0, 0)))

    kernel = functools.partial(
        _cross_attn_kernel, scale=scale, B=B, L=L, S=S, H=H,
        mix=mix, has_mask=has_mask)

    out = pl.pallas_call(
        kernel,
        out_shape=jax.ShapeDtypeStruct((R, Dv), queries.dtype),
        grid=(1,),                       # single step: B and H fused in-kernel
        in_specs=in_specs,
        out_specs=pl.BlockSpec((R, Dv), lambda i: (0, 0)),
        compiler_params=pltpu.CompilerParams(
            dimension_semantics=("arbitrary",)),
    )(*args)

    # Kernel rows are already in (b, l, h) order (mix=False) or (b, h, l) order
    # (mix=True), so the final (B, L, d_model) view is a free reshape either way.
    return out.reshape(B, L, H * Dv)


def _reference(queries, keys, values, mask, n_heads, mix=True):
    """Pure-JAX reference mirroring the PyTorch module (eval mode)."""
    B, L, d_model = queries.shape
    _, S, _ = keys.shape
    H = n_heads
    E = d_model // H
    q = queries.reshape(B, L, H, E)
    k = keys.reshape(B, S, H, E)
    v = values.reshape(B, S, H, E)
    scale = 1.0 / math.sqrt(E)
    scores = jnp.einsum("blhe,bshe->bhls", q, k, precision="highest") * scale
    if mask is not None:
        scores = jnp.where(mask[None, None], -jnp.inf, scores)
    A = jax.nn.softmax(scores, axis=-1)
    out = jnp.einsum("bhls,bshd->blhd", A, v, precision="highest")   # (B, L, H, E)
    if mix:
        out = out.transpose(0, 2, 1, 3)                              # (B, H, L, E)
    return out.reshape(B, L, H * E)


if __name__ == "__main__":
    # Small shapes implied by the forward: batch=2, L=8, S=8, d_model=32, heads=4
    B, L, S, d_model, H = 2, 8, 8, 32, 4
    key = jax.random.PRNGKey(0)
    kq, kk, kv = jax.random.split(key, 3)
    queries = jax.random.normal(kq, (B, L, d_model), dtype=jnp.float32)
    keys = jax.random.normal(kk, (B, S, d_model), dtype=jnp.float32)
    values = jax.random.normal(kv, (B, S, d_model), dtype=jnp.float32)

    # no-mask, mix=True (module defaults)
    out = jax.block_until_ready(
        cross_attention(queries, keys, values, None, n_heads=H, mix=True))
    ref = _reference(queries, keys, values, None, H, mix=True)
    assert out.shape == (B, L, d_model), out.shape
    assert jnp.allclose(out, ref, atol=1e-3, rtol=1e-3), float(jnp.abs(out - ref).max())

    # masked, mix=True (mask has no fully-masked rows)
    mask = jnp.arange(S)[None, :] > (jnp.arange(L)[:, None] + 3)   # (L, S) bool
    out_m = jax.block_until_ready(
        cross_attention(queries, keys, values, mask, n_heads=H, mix=True))
    ref_m = _reference(queries, keys, values, mask, H, mix=True)
    assert jnp.allclose(out_m, ref_m, atol=1e-3, rtol=1e-3), float(jnp.abs(out_m - ref_m).max())

    # no-mask, mix=False
    out_nm = jax.block_until_ready(
        cross_attention(queries, keys, values, None, n_heads=H, mix=False))
    ref_nm = _reference(queries, keys, values, None, H, mix=False)
    assert jnp.allclose(out_nm, ref_nm, atol=1e-3, rtol=1e-3), float(jnp.abs(out_nm - ref_nm).max())

    # masked, mix=False
    out_mm = jax.block_until_ready(
        cross_attention(queries, keys, values, mask, n_heads=H, mix=False))
    ref_mm = _reference(queries, keys, values, mask, H, mix=False)
    assert jnp.allclose(out_mm, ref_mm, atol=1e-3, rtol=1e-3), float(jnp.abs(out_mm - ref_mm).max())

    print("KERNEL_OK")
</pallas_src>

<mosaic_0001>
module attributes {stable_mosaic.version = 11 : i64} {
  func.func @_cross_attn_kernel(%arg0: i32, %arg1: memref<64x8xf32, #tpu.memory_space<vmem>>, %arg2: memref<64x8xf32, #tpu.memory_space<vmem>>, %arg3: memref<64x8xf32, #tpu.memory_space<vmem>>, %arg4: memref<64x8xf32, #tpu.memory_space<vmem>>) attributes {dimension_semantics = [#tpu.dimension_semantics<arbitrary>], iteration_bounds = array<i64: 1>, scalar_prefetch = 0 : i64, scratch_operands = 0 : i64, tpu.core_type = #tpu.core_type<tc>, window_params = [{pipeline_mode = #tpu.pipeline_mode<synchronous>, transform_indices = @transform_0, window_bounds = array<i64: 64, 8>}, {pipeline_mode = #tpu.pipeline_mode<synchronous>, transform_indices = @transform_1, window_bounds = array<i64: 64, 8>}, {pipeline_mode = #tpu.pipeline_mode<synchronous>, transform_indices = @transform_2, window_bounds = array<i64: 64, 8>}, {pipeline_mode = #tpu.pipeline_mode<synchronous>, transform_indices = @transform_3, window_bounds = array<i64: 64, 8>}]} {
    %c0 = arith.constant 0 : index
    %c0_0 = arith.constant 0 : index
    %0 = vector.load %arg1[%c0, %c0_0] : memref<64x8xf32, #tpu.memory_space<vmem>>, vector<64x8xf32>
    %c0_1 = arith.constant 0 : index
    %c0_2 = arith.constant 0 : index
    %1 = vector.load %arg2[%c0_1, %c0_2] : memref<64x8xf32, #tpu.memory_space<vmem>>, vector<64x8xf32>
    %c0_3 = arith.constant 0 : index
    %c0_4 = arith.constant 0 : index
    %2 = vector.load %arg3[%c0_3, %c0_4] : memref<64x8xf32, #tpu.memory_space<vmem>>, vector<64x8xf32>
    %cst = arith.constant 0.353553385 : f32
    %3 = vector.broadcast %cst : f32 to vector<64x8xf32>
    %4 = arith.mulf %0, %3 : vector<64x8xf32>
    %cst_5 = arith.constant dense<0.000000e+00> : vector<64x64xf32>
    %5 = tpu.matmul %4, %1, %cst_5 {dimension_numbers = #tpu.dot_dimension_numbers<[1], [1], [0], [0], [0, 0, 1, 0], [], []>} : vector<64x8xf32>, vector<64x8xf32>, vector<64x64xf32> -> vector<64x64xf32>
    %6 = tpu.iota {dimensions = array<i32: 0>} : vector<64x64xi32>
    %7 = tpu.iota {dimensions = array<i32: 1>} : vector<64x64xi32>
    %c5_i32 = arith.constant 5 : i32
    %8 = vector.broadcast %c5_i32 : i32 to vector<64x64xi32>
    %9 = arith.shrsi %6, %8 : vector<64x64xi32>
    %c5_i32_6 = arith.constant 5 : i32
    %10 = vector.broadcast %c5_i32_6 : i32 to vector<64x64xi32>
    %11 = arith.shrsi %7, %10 : vector<64x64xi32>
    %12 = arith.cmpi eq, %9, %11 : vector<64x64xi32>
    %c3_i32 = arith.constant 3 : i32
    %13 = vector.broadcast %c3_i32 : i32 to vector<64x64xi32>
    %14 = arith.andi %6, %13 : vector<64x64xi32>
    %c3_i32_7 = arith.constant 3 : i32
    %15 = vector.broadcast %c3_i32_7 : i32 to vector<64x64xi32>
    %16 = arith.andi %7, %15 : vector<64x64xi32>
    %17 = arith.cmpi eq, %14, %16 : vector<64x64xi32>
    %18 = arith.andi %12, %17 : vector<64x64xi1>
    %cst_8 = arith.constant -3.000000e+38 : f32
    %19 = vector.broadcast %cst_8 : f32 to vector<64x64xf32>
    %20 = arith.select %18, %5, %19 : vector<64x64xi1>, vector<64x64xf32>
    %cst_9 = arith.constant dense<0xFF800000> : vector<64xf32>
    %21 = vector.multi_reduction <maximumf>, %20, %cst_9 [1] : vector<64x64xf32> to vector<64xf32>
    %22 = vector.shape_cast %21 : vector<64xf32> to vector<64x1xf32>
    %23 = vector.broadcast %22 : vector<64x1xf32> to vector<64x64xf32>
    %24 = arith.subf %20, %23 : vector<64x64xf32>
    %25 = math.exp %24 : vector<64x64xf32>
    %cst_10 = arith.constant dense<0.000000e+00> : vector<64xf32>
    %26 = vector.multi_reduction <add>, %25, %cst_10 [1] : vector<64x64xf32> to vector<64xf32>
    %27 = vector.shape_cast %26 : vector<64xf32> to vector<64x1xf32>
    %cst_11 = arith.constant dense<0.000000e+00> : vector<64x8xf32>
    %28 = tpu.matmul %25, %2, %cst_11 {dimension_numbers = #tpu.dot_dimension_numbers<[1], [0], [0], [1], [0, 0, 1, 1], [], []>} : vector<64x64xf32>, vector<64x8xf32>, vector<64x8xf32> -> vector<64x8xf32>
    %29 = vector.broadcast %27 : vector<64x1xf32> to vector<64x8xf32>
    %30 = arith.divf %28, %29 : vector<64x8xf32>
    %31 = tpu.iota {dimensions = array<i32: 0>} : vector<64x64xi32>
    %32 = tpu.iota {dimensions = array<i32: 1>} : vector<64x64xi32>
    %c5_i32_12 = arith.constant 5 : i32
    %33 = vector.broadcast %c5_i32_12 : i32 to vector<64x64xi32>
    %34 = arith.shrsi %31, %33 : vector<64x64xi32>
    %c3_i32_13 = arith.constant 3 : i32
    %35 = vector.broadcast %c3_i32_13 : i32 to vector<64x64xi32>
    %36 = arith.shrsi %31, %35 : vector<64x64xi32>
    %c3_i32_14 = arith.constant 3 : i32
    %37 = vector.broadcast %c3_i32_14 : i32 to vector<64x64xi32>
    %38 = arith.andi %36, %37 : vector<64x64xi32>
    %c7_i32 = arith.constant 7 : i32
    %39 = vector.broadcast %c7_i32 : i32 to vector<64x64xi32>
    %40 = arith.andi %31, %39 : vector<64x64xi32>
    %c32_i32 = arith.constant 32 : i32
    %41 = vector.broadcast %c32_i32 : i32 to vector<64x64xi32>
    %42 = arith.muli %34, %41 : vector<64x64xi32>
    %c4_i32 = arith.constant 4 : i32
    %43 = vector.broadcast %c4_i32 : i32 to vector<64x64xi32>
    %44 = arith.muli %40, %43 : vector<64x64xi32>
    %45 = arith.addi %42, %44 : vector<64x64xi32>
    %46 = arith.addi %45, %38 : vector<64x64xi32>
    %47 = arith.cmpi eq, %32, %46 : vector<64x64xi32>
    %cst_15 = arith.constant 1.000000e+00 : f32
    %cst_16 = arith.constant 0.000000e+00 : f32
    %48 = vector.broadcast %cst_15 : f32 to vector<64x64xf32>
    %49 = vector.broadcast %cst_16 : f32 to vector<64x64xf32>
    %50 = arith.select %47, %48, %49 : vector<64x64xi1>, vector<64x64xf32>
    %cst_17 = arith.constant dense<0.000000e+00> : vector<64x8xf32>
    %51 = tpu.matmul %50, %30, %cst_17 {dimension_numbers = #tpu.dot_dimension_numbers<[1], [0], [0], [1], [0, 0, 1, 1], [], []>} : vector<64x64xf32>, vector<64x8xf32>, vector<64x8xf32> -> vector<64x8xf32>
    %c0_18 = arith.constant 0 : index
    %c0_19 = arith.constant 0 : index
    %52 = vector.load %arg4[%c0_18, %c0_19] : memref<64x8xf32, #tpu.memory_space<vmem>>, vector<64x8xf32>
    tpu.vector_store %arg4[%c0_18, %c0_19], %51 {strides = array<i32>} : memref<64x8xf32, #tpu.memory_space<vmem>>, vector<64x8xf32>,
    return
  }
  func.func @transform_0(%arg0: i32) -> (i32, i32) {
    %c0_i32 = arith.constant 0 : i32
    %c0_i32_0 = arith.constant 0 : i32
    %c0_i32_1 = arith.constant 0 : i32
    return %c0_i32, %c0_i32_0 : i32, i32
  }
  func.func @transform_1(%arg0: i32) -> (i32, i32) {
    %c0_i32 = arith.constant 0 : i32
    %c0_i32_0 = arith.constant 0 : i32
    %c0_i32_1 = arith.constant 0 : i32
    return %c0_i32, %c0_i32_0 : i32, i32
  }
  func.func @transform_2(%arg0: i32) -> (i32, i32) {
    %c0_i32 = arith.constant 0 : i32
    %c0_i32_0 = arith.constant 0 : i32
    %c0_i32_1 = arith.constant 0 : i32
    return %c0_i32, %c0_i32_0 : i32, i32
  }
  func.func @transform_3(%arg0: i32) -> (i32, i32) {
    %c0_i32 = arith.constant 0 : i32
    %c0_i32_0 = arith.constant 0 : i32
    %c0_i32_1 = arith.constant 0 : i32
    return %c0_i32, %c0_i32_0 : i32, i32
  }
}

</mosaic_0001>

<llo_original>
// kernel: tpu_custom_call.1
$region0: #{tpu_custom_call.1}
  #allocation0 [shape = 'u32[]', space=smem, size = 0x4, offset = 0x4, fixed_abs, tag = 'smem constant byte address 0x4 - core index']
  #allocation1 [shape = 'u32[144,128]{1,0:T(1,128)}', space=vmem, size = 0x12000, scoped, tag = 'internal scratch']
  %s0 = inlined_call_operand.vmem [shape: f32[64,8], index: 0, kind: input, shape index: {}]
  %s1 = inlined_call_operand.vmem [shape: f32[64,8], index: 1, kind: input, shape index: {}]
  %s2 = inlined_call_operand.vmem [shape: f32[64,8], index: 2, kind: input, shape index: {}]
  %s3 = inlined_call_operand.vmem [shape: f32[64,8], index: 3, kind: output, shape index: {}]
  %s4 = sld [smem:[#allocation0]]
  $region22: #{tpu_custom_call.1} parent=0
    _
  %s6 = ssub.s32 1, %s4
  %s7 = scalar_select 0, %s6, %s4
  // Predicated region
  $region2: #{tpu_custom_call.1} parent=0 // pred_check
    _
  $region3: #{tpu_custom_call.1} parent=0 // pred_check_branch
    %9 = sbr.rel (0) target = $region5
  $region4: #{tpu_custom_call.1} parent=0 // pred_region
    _
  $region5: #{tpu_custom_call.1} parent=0 // pred_fallthru
    _
  // Predicated region
  $region6: #{tpu_custom_call.1} parent=0 // pred_check
    _
  $region7: #{tpu_custom_call.1} parent=0 // pred_check_branch
    %11 = sbr.rel (0) target = $region9
  $region8: #{tpu_custom_call.1} parent=0 // pred_region
    _
  $region9: #{tpu_custom_call.1} parent=0 // pred_fallthru
    _
  // Predicated region
  $region10: #{tpu_custom_call.1} parent=0 // pred_check
    _
  $region11: #{tpu_custom_call.1} parent=0 // pred_check_branch
    %13 = sbr.rel (0) target = $region13
  $region12: #{tpu_custom_call.1} parent=0 // pred_region
    _
  $region13: #{tpu_custom_call.1} parent=0 // pred_fallthru
    _
  %v14 = vld [vmem:[%s0] sm:$0xff]
  %v15 = vld [vmem:[%s0 + $0x8] sm:$0xff]
  %v16 = vld [vmem:[%s0 + $0x10] sm:$0xff]
  %v17 = vld [vmem:[%s0 + $0x18] sm:$0xff]
  %v18 = vld [vmem:[%s0 + $0x20] sm:$0xff]
  %v19 = vld [vmem:[%s0 + $0x28] sm:$0xff]
  %v20 = vld [vmem:[%s0 + $0x30] sm:$0xff]
  %v21 = vld [vmem:[%s0 + $0x38] sm:$0xff]
  %v22 = vld [vmem:[%s1] sm:$0xff]
  %v23 = vld [vmem:[%s1 + $0x8] sm:$0xff]
  %v24 = vld [vmem:[%s1 + $0x10] sm:$0xff]
  %v25 = vld [vmem:[%s1 + $0x18] sm:$0xff]
  %v26 = vld [vmem:[%s1 + $0x20] sm:$0xff]
  %v27 = vld [vmem:[%s1 + $0x28] sm:$0xff]
  %v28 = vld [vmem:[%s1 + $0x30] sm:$0xff]
  %v29 = vld [vmem:[%s1 + $0x38] sm:$0xff]
  %v30 = vld [vmem:[%s2] sm:$0xff]
  %v31 = vld [vmem:[%s2 + $0x8] sm:$0xff]
  %v32 = vld [vmem:[%s2 + $0x10] sm:$0xff]
  %v33 = vld [vmem:[%s2 + $0x18] sm:$0xff]
  %v34 = vld [vmem:[%s2 + $0x20] sm:$0xff]
  %v35 = vld [vmem:[%s2 + $0x28] sm:$0xff]
  %v36 = vld [vmem:[%s2 + $0x30] sm:$0xff]
  %v37 = vld [vmem:[%s2 + $0x38] sm:$0xff]
  %v38 = vmul.f32 %v14, 0.35355338
  %v39 = vmul.f32 %v15, 0.35355338
  %v40 = vmul.f32 %v16, 0.35355338
  %v41 = vmul.f32 %v17, 0.35355338
  %v42 = vmul.f32 %v18, 0.35355338
  %v43 = vmul.f32 %v19, 0.35355338
  %v44 = vmul.f32 %v20, 0.35355338
  %v45 = vmul.f32 %v21, 0.35355338
  %vm46 = vcmask 64512
  %v48 = vsel %vm46, %v38, 0
  %v51 = vsel %vm46, %v39, 0
  %v54 = vsel %vm46, %v40, 0
  %v57 = vsel %vm46, %v41, 0
  %v60 = vsel %vm46, %v42, 0
  %v63 = vsel %vm46, %v43, 0
  %v66 = vsel %vm46, %v44, 0
  %v69 = vsel %vm46, %v45, 0
  %v72 = vsel %vm46, %v22, 0
  %v75 = vsel %vm46, %v23, 0
  %v78 = vsel %vm46, %v24, 0
  %v81 = vsel %vm46, %v25, 0
  %v84 = vsel %vm46, %v26, 0
  %v87 = vsel %vm46, %v27, 0
  %v90 = vsel %vm46, %v28, 0
  %v93 = vsel %vm46, %v29, 0
  %95 = vmatprep.subr.mxu0 0.0
  %96 = vmatpush1.xpose.msra.mxu0 0.0
  %97 = vmatprep.subr.mxu0 0.0
  %98 = vmatpush1.xpose.msra.mxu0 0.0
  %99 = vmatprep.subr.mxu0 0.0
  %100 = vmatpush1.xpose.msra.mxu0 0.0
  %101 = vmatprep.subr.mxu0 0.0
  %102 = vmatpush1.xpose.msra.mxu0 0.0
  %103 = vmatprep.subr.mxu0 0.0
  %104 = vmatpush1.xpose.msra.mxu0 0.0
  %105 = vmatprep.subr.mxu0 0.0
  %106 = vmatpush1.xpose.msra.mxu0 0.0
  %107 = vmatprep.subr.mxu0 0.0
  %108 = vmatpush1.xpose.msra.mxu0 0.0
  %109 = vmatprep.subr.mxu0 0.0
  %110 = vmatpush1.xpose.msra.mxu0 0.0
  %111 = vmatprep.subr.mxu0 0.0
  %112 = vmatpush1.xpose.msra.mxu0 %v93
  %113 = vmatprep.subr.mxu0 0.0
  %114 = vmatpush1.xpose.msra.mxu0 %v90
  %115 = vmatprep.subr.mxu0 0.0
  %116 = vmatpush1.xpose.msra.mxu0 %v87
  %117 = vmatprep.subr.mxu0 0.0
  %118 = vmatpush1.xpose.msra.mxu0 %v84
  %119 = vmatprep.subr.mxu0 0.0
  %120 = vmatpush1.xpose.msra.mxu0 %v81
  %121 = vmatprep.subr.mxu0 0.0
  %122 = vmatpush1.xpose.msra.mxu0 %v78
  %123 = vmatprep.subr.mxu0 0.0
  %124 = vmatpush1.xpose.msra.mxu0 %v75
  %125 = vmatprep.subr.mxu0 0.0
  %126 = vmatpush1.xpose.msra.mxu0 %v72
  %127 = vmatprep.subr.mxu0 0.0
  %128 = vmatpush2.xpose.msra.mxu0 0.0
  %129 = vmatprep.subr.mxu0 0.0
  %130 = vmatpush2.xpose.msra.mxu0 0.0
  %131 = vmatprep.subr.mxu0 0.0
  %132 = vmatpush2.xpose.msra.mxu0 0.0
  %133 = vmatprep.subr.mxu0 0.0
  %134 = vmatpush2.xpose.msra.mxu0 0.0
  %135 = vmatprep.subr.mxu0 0.0
  %136 = vmatpush2.xpose.msra.mxu0 0.0
  %137 = vmatprep.subr.mxu0 0.0
  %138 = vmatpush2.xpose.msra.mxu0 0.0
  %139 = vmatprep.subr.mxu0 0.0
  %140 = vmatpush2.xpose.msra.mxu0 0.0
  %141 = vmatprep.subr.mxu0 0.0
  %142 = vmatpush2.xpose.msra.mxu0 0.0
  %143 = vmatprep.subr.mxu0 0.0
  %144 = vmatpush2.xpose.msra.mxu0 0.0
  %145 = vmatprep.subr.mxu0 0.0
  %146 = vmatpush2.xpose.msra.mxu0 0.0
  %147 = vmatprep.subr.mxu0 0.0
  %148 = vmatpush2.xpose.msra.mxu0 0.0
  %149 = vmatprep.subr.mxu0 0.0
  %150 = vmatpush2.xpose.msra.mxu0 0.0
  %151 = vmatprep.subr.mxu0 0.0
  %152 = vmatpush2.xpose.msra.mxu0 0.0
  %153 = vmatprep.subr.mxu0 0.0
  %154 = vmatpush2.xpose.msra.mxu0 0.0
  %155 = vmatprep.subr.mxu0 0.0
  %156 = vmatpush2.xpose.msra.mxu0 0.0
  %157 = vmatprep.subr.mxu0 0.0
  %158 = vmatpush2.xpose.msra.mxu0 0.0
  %159 = vmatprep.mubr.f32.mxu0 0.0
  %160 = vmatmul.mubr.f32.gmra.mxu0 %v48
  %v161 = vpop.f32.mrf.mxu0
  %v162 = vadd.f32 0.0, %v161
  %v163 = vpop.f32.mrf.mxu0
  %164 = vmatprep.mubr.f32.mxu0 0.0
  %165 = vmatmul.mubr.f32.gmra.mxu0 %v51
  %v166 = vpop.f32.mrf.mxu0
  %v167 = vadd.f32 0.0, %v166
  %v168 = vpop.f32.mrf.mxu0
  %169 = vmatprep.mubr.f32.mxu0 0.0
  %170 = vmatmul.mubr.f32.gmra.mxu0 %v54
  %v171 = vpop.f32.mrf.mxu0
  %v172 = vadd.f32 0.0, %v171
  %v173 = vpop.f32.mrf.mxu0
  %174 = vmatprep.mubr.f32.mxu0 0.0
  %175 = vmatmul.mubr.f32.gmra.mxu0 %v57
  %v176 = vpop.f32.mrf.mxu0
  %v177 = vadd.f32 0.0, %v176
  %v178 = vpop.f32.mrf.mxu0
  %179 = vmatprep.mubr.f32.mxu0 0.0
  %180 = vmatmul.mubr.f32.gmra.mxu0 %v60
  %v181 = vpop.f32.mrf.mxu0
  %v182 = vadd.f32 0.0, %v181
  %v183 = vpop.f32.mrf.mxu0
  %184 = vmatprep.mubr.f32.mxu0 0.0
  %185 = vmatmul.mubr.f32.gmra.mxu0 %v63
  %v186 = vpop.f32.mrf.mxu0
  %v187 = vadd.f32 0.0, %v186
  %v188 = vpop.f32.mrf.mxu0
  %189 = vmatprep.mubr.f32.mxu0 0.0
  %190 = vmatmul.mubr.f32.gmra.mxu0 %v66
  %v191 = vpop.f32.mrf.mxu0
  %v192 = vadd.f32 0.0, %v191
  %v193 = vpop.f32.mrf.mxu0
  %194 = vmatprep.mubr.f32.mxu0 0.0
  %195 = vmatmul.mubr.f32.gmra.mxu0 %v69
  %v196 = vpop.f32.mrf.mxu0
  %v197 = vadd.f32 0.0, %v196
  %v198 = vpop.f32.mrf.mxu0
  %199 = vdwg.mxu0
  %v200 = vlaneseq
  %v201 = vshrl.u32 %v200, 7
  %v202 = vadd.s32 %v201, 8
  %v203 = vadd.s32 %v201, 16
  %v204 = vadd.s32 %v201, 24
  %v205 = vadd.s32 %v201, 32
  %v206 = vadd.s32 %v201, 40
  %v207 = vadd.s32 %v201, 48
  %v208 = vadd.s32 %v201, 56
  %v209 = vlaneseq
  %v210 = vand.u32 %v209, 127
  %v211 = vshra.s32 %v201, 5
  %v212 = vshra.s32 %v202, 5
  %v213 = vshra.s32 %v203, 5
  %v214 = vshra.s32 %v204, 5
  %v215 = vshra.s32 %v205, 5
  %v216 = vshra.s32 %v206, 5
  %v217 = vshra.s32 %v207, 5
  %v218 = vshra.s32 %v208, 5
  %v219 = vshra.s32 %v210, 5
  %vm220 = vcmp.eq.s32.totalorder %v211, %v219
  %vm221 = vcmp.eq.s32.totalorder %v212, %v219
  %vm222 = vcmp.eq.s32.totalorder %v213, %v219
  %vm223 = vcmp.eq.s32.totalorder %v214, %v219
  %vm224 = vcmp.eq.s32.totalorder %v215, %v219
  %vm225 = vcmp.eq.s32.totalorder %v216, %v219
  %vm226 = vcmp.eq.s32.totalorder %v217, %v219
  %vm227 = vcmp.eq.s32.totalorder %v218, %v219
  %v228 = vand.u32 %v201, 3
  %v229 = vand.u32 %v202, 3
  %v230 = vand.u32 %v203, 3
  %v231 = vand.u32 %v204, 3
  %v232 = vand.u32 %v205, 3
  %v233 = vand.u32 %v206, 3
  %v234 = vand.u32 %v207, 3
  %v235 = vand.u32 %v208, 3
  %v236 = vand.u32 %v210, 3
  %vm237 = vcmp.eq.s32.totalorder %v228, %v236
  %vm238 = vcmp.eq.s32.totalorder %v229, %v236
  %vm239 = vcmp.eq.s32.totalorder %v230, %v236
  %vm240 = vcmp.eq.s32.totalorder %v231, %v236
  %vm241 = vcmp.eq.s32.totalorder %v232, %v236
  %vm242 = vcmp.eq.s32.totalorder %v233, %v236
  %vm243 = vcmp.eq.s32.totalorder %v234, %v236
  %vm244 = vcmp.eq.s32.totalorder %v235, %v236
  %vm245 = vmand %vm220, %vm237
  %vm246 = vmand %vm221, %vm238
  %vm247 = vmand %vm222, %vm239
  %vm248 = vmand %vm223, %vm240
  %vm249 = vmand %vm224, %vm241
  %vm250 = vmand %vm225, %vm242
  %vm251 = vmand %vm226, %vm243
  %vm252 = vmand %vm227, %vm244
  %v253 = vsel %vm245, %v162, -3e+38
  %v254 = vsel %vm246, %v167, -3e+38
  %v255 = vsel %vm247, %v172, -3e+38
  %v256 = vsel %vm248, %v177, -3e+38
  %v257 = vsel %vm249, %v182, -3e+38
  %v258 = vsel %vm250, %v187, -3e+38
  %v259 = vsel %vm251, %v192, -3e+38
  %v260 = vsel %vm252, %v197, -3e+38
  %vm261 = vcmask 523264
  %v262 = vsel %vm261, %v253, -inf
  %263 = vmax.xlane.f32.xlu0 %v262
  %v264 = vpop.xlane.xlu0 %263
  %v265 = vsel %vm261, %v254, -inf
  %266 = vmax.xlane.f32.xlu0 %v265
  %v267 = vpop.xlane.xlu0 %266
  %v268 = vsel %vm261, %v255, -inf
  %269 = vmax.xlane.f32.xlu0 %v268
  %v270 = vpop.xlane.xlu0 %269
  %v271 = vsel %vm261, %v256, -inf
  %272 = vmax.xlane.f32.xlu0 %v271
  %v273 = vpop.xlane.xlu0 %272
  %v274 = vsel %vm261, %v257, -inf
  %275 = vmax.xlane.f32.xlu0 %v274
  %v276 = vpop.xlane.xlu0 %275
  %v277 = vsel %vm261, %v258, -inf
  %278 = vmax.xlane.f32.xlu0 %v277
  %v279 = vpop.xlane.xlu0 %278
  %v280 = vsel %vm261, %v259, -inf
  %281 = vmax.xlane.f32.xlu0 %v280
  %v282 = vpop.xlane.xlu0 %281
  %v283 = vsel %vm261, %v260, -inf
  %284 = vmax.xlane.f32.xlu0 %v283
  %v285 = vpop.xlane.xlu0 %284
  %v286 = vsub.f32 %v253, %v264
  %v287 = vsub.f32 %v254, %v267
  %v288 = vsub.f32 %v255, %v270
  %v289 = vsub.f32 %v256, %v273
  %v290 = vsub.f32 %v257, %v276
  %v291 = vsub.f32 %v258, %v279
  %v292 = vsub.f32 %v259, %v282
  %v293 = vsub.f32 %v260, %v285
  %v294 = vmul.f32 %v286, 1.442695
  %v295 = vpow.pop %v294
  %v296 = vmul.f32 %v287, 1.442695
  %v297 = vpow.pop %v296
  %v298 = vmul.f32 %v288, 1.442695
  %v299 = vpow.pop %v298
  %v300 = vmul.f32 %v289, 1.442695
  %v301 = vpow.pop %v300
  %v302 = vmul.f32 %v290, 1.442695
  %v303 = vpow.pop %v302
  %v304 = vmul.f32 %v291, 1.442695
  %v305 = vpow.pop %v304
  %v306 = vmul.f32 %v292, 1.442695
  %v307 = vpow.pop %v306
  %v308 = vmul.f32 %v293, 1.442695
  %v309 = vpow.pop %v308
  %v310 = vsel %vm261, %v295, 0.0
  %311 = vadd.xlane.f32.xlu0 %v310
  %v312 = vpop.xlane.xlu0 %311
  %v313 = vsel %vm261, %v297, 0.0
  %314 = vadd.xlane.f32.xlu0 %v313
  %v315 = vpop.xlane.xlu0 %314
  %v316 = vsel %vm261, %v299, 0.0
  %317 = vadd.xlane.f32.xlu0 %v316
  %v318 = vpop.xlane.xlu0 %317
  %v319 = vsel %vm261, %v301, 0.0
  %320 = vadd.xlane.f32.xlu0 %v319
  %v321 = vpop.xlane.xlu0 %320
  %v322 = vsel %vm261, %v303, 0.0
  %323 = vadd.xlane.f32.xlu0 %v322
  %v324 = vpop.xlane.xlu0 %323
  %v325 = vsel %vm261, %v305, 0.0
  %326 = vadd.xlane.f32.xlu0 %v325
  %v327 = vpop.xlane.xlu0 %326
  %v328 = vsel %vm261, %v307, 0.0
  %329 = vadd.xlane.f32.xlu0 %v328
  %v330 = vpop.xlane.xlu0 %329
  %v331 = vsel %vm261, %v309, 0.0
  %332 = vadd.xlane.f32.xlu0 %v331
  %v333 = vpop.xlane.xlu0 %332
  %v335 = vsel %vm261, %v295, 0
  %v338 = vsel %vm261, %v297, 0
  %v341 = vsel %vm261, %v299, 0
  %v344 = vsel %vm261, %v301, 0
  %v347 = vsel %vm261, %v303, 0
  %v350 = vsel %vm261, %v305, 0
  %v353 = vsel %vm261, %v307, 0
  %v356 = vsel %vm261, %v309, 0
  %358 = vmatprep.subr.mxu0 0.0
  %359 = vmatpush1.msra.mxu0 0.0
  %360 = vmatprep.subr.mxu0 0.0
  %361 = vmatpush1.msra.mxu0 0.0
  %362 = vmatprep.subr.mxu0 0.0
  %363 = vmatpush1.msra.mxu0 0.0
  %364 = vmatprep.subr.mxu0 0.0
  %365 = vmatpush1.msra.mxu0 0.0
  %366 = vmatprep.subr.mxu0 0.0
  %367 = vmatpush1.msra.mxu0 0.0
  %368 = vmatprep.subr.mxu0 0.0
  %369 = vmatpush1.msra.mxu0 0.0
  %370 = vmatprep.subr.mxu0 0.0
  %371 = vmatpush1.msra.mxu0 0.0
  %372 = vmatprep.subr.mxu0 0.0
  %373 = vmatpush1.msra.mxu0 0.0
  %374 = vmatprep.subr.mxu0 0.0
  %375 = vmatpush1.msra.mxu0 %v37
  %376 = vmatprep.subr.mxu0 0.0
  %377 = vmatpush1.msra.mxu0 %v36
  %378 = vmatprep.subr.mxu0 0.0
  %379 = vmatpush1.msra.mxu0 %v35
  %380 = vmatprep.subr.mxu0 0.0
  %381 = vmatpush1.msra.mxu0 %v34
  %382 = vmatprep.subr.mxu0 0.0
  %383 = vmatpush1.msra.mxu0 %v33
  %384 = vmatprep.subr.mxu0 0.0
  %385 = vmatpush1.msra.mxu0 %v32
  %386 = vmatprep.subr.mxu0 0.0
  %387 = vmatpush1.msra.mxu0 %v31
  %388 = vmatprep.subr.mxu0 0.0
  %389 = vmatpush1.msra.mxu0 %v30
  %390 = vmatprep.subr.mxu0 0.0
  %391 = vmatpush2.msra.mxu0 0.0
  %392 = vmatprep.subr.mxu0 0.0
  %393 = vmatpush2.msra.mxu0 0.0
  %394 = vmatprep.subr.mxu0 0.0
  %395 = vmatpush2.msra.mxu0 0.0
  %396 = vmatprep.subr.mxu0 0.0
  %397 = vmatpush2.msra.mxu0 0.0
  %398 = vmatprep.subr.mxu0 0.0
  %399 = vmatpush2.msra.mxu0 0.0
  %400 = vmatprep.subr.mxu0 0.0
  %401 = vmatpush2.msra.mxu0 0.0
  %402 = vmatprep.subr.mxu0 0.0
  %403 = vmatpush2.msra.mxu0 0.0
  %404 = vmatprep.subr.mxu0 0.0
  %405 = vmatpush2.msra.mxu0 0.0
  %406 = vmatprep.subr.mxu0 0.0
  %407 = vmatpush2.msra.mxu0 0.0
  %408 = vmatprep.subr.mxu0 0.0
  %409 = vmatpush2.msra.mxu0 0.0
  %410 = vmatprep.subr.mxu0 0.0
  %411 = vmatpush2.msra.mxu0 0.0
  %412 = vmatprep.subr.mxu0 0.0
  %413 = vmatpush2.msra.mxu0 0.0
  %414 = vmatprep.subr.mxu0 0.0
  %415 = vmatpush2.msra.mxu0 0.0
  %416 = vmatprep.subr.mxu0 0.0
  %417 = vmatpush2.msra.mxu0 0.0
  %418 = vmatprep.subr.mxu0 0.0
  %419 = vmatpush2.msra.mxu0 0.0
  %420 = vmatprep.subr.mxu0 0.0
  %421 = vmatpush2.msra.mxu0 0.0
  %422 = vmatprep.mubr.f32.mxu0 0.0
  %423 = vmatmul.mubr.f32.gmra.mxu0 %v335
  %v424 = vpop.f32.mrf.mxu0
  %v425 = vadd.f32 0.0, %v424
  %v426 = vpop.f32.mrf.mxu0
  %427 = vmatprep.mubr.f32.mxu0 0.0
  %428 = vmatmul.mubr.f32.gmra.mxu0 %v338
  %v429 = vpop.f32.mrf.mxu0
  %v430 = vadd.f32 0.0, %v429
  %v431 = vpop.f32.mrf.mxu0
  %432 = vmatprep.mubr.f32.mxu0 0.0
  %433 = vmatmul.mubr.f32.gmra.mxu0 %v341
  %v434 = vpop.f32.mrf.mxu0
  %v435 = vadd.f32 0.0, %v434
  %v436 = vpop.f32.mrf.mxu0
  %437 = vmatprep.mubr.f32.mxu0 0.0
  %438 = vmatmul.mubr.f32.gmra.mxu0 %v344
  %v439 = vpop.f32.mrf.mxu0
  %v440 = vadd.f32 0.0, %v439
  %v441 = vpop.f32.mrf.mxu0
  %442 = vmatprep.mubr.f32.mxu0 0.0
  %443 = vmatmul.mubr.f32.gmra.mxu0 %v347
  %v444 = vpop.f32.mrf.mxu0
  %v445 = vadd.f32 0.0, %v444
  %v446 = vpop.f32.mrf.mxu0
  %447 = vmatprep.mubr.f32.mxu0 0.0
  %448 = vmatmul.mubr.f32.gmra.mxu0 %v350
  %v449 = vpop.f32.mrf.mxu0
  %v450 = vadd.f32 0.0, %v449
  %v451 = vpop.f32.mrf.mxu0
  %452 = vmatprep.mubr.f32.mxu0 0.0
  %453 = vmatmul.mubr.f32.gmra.mxu0 %v353
  %v454 = vpop.f32.mrf.mxu0
  %v455 = vadd.f32 0.0, %v454
  %v456 = vpop.f32.mrf.mxu0
  %457 = vmatprep.mubr.f32.mxu0 0.0
  %458 = vmatmul.mubr.f32.gmra.mxu0 %v356
  %v459 = vpop.f32.mrf.mxu0
  %v460 = vadd.f32 0.0, %v459
  %v461 = vpop.f32.mrf.mxu0
  %462 = vdwg.mxu0
  %v463 = vrcp.pop %v312
  %v464 = vmul.f32 %v425, %v463
  %v465 = vrcp.pop %v315
  %v466 = vmul.f32 %v430, %v465
  %v467 = vrcp.pop %v318
  %v468 = vmul.f32 %v435, %v467
  %v469 = vrcp.pop %v321
  %v470 = vmul.f32 %v440, %v469
  %v471 = vrcp.pop %v324
  %v472 = vmul.f32 %v445, %v471
  %v473 = vrcp.pop %v327
  %v474 = vmul.f32 %v450, %v473
  %v475 = vrcp.pop %v330
  %v476 = vmul.f32 %v455, %v475
  %v477 = vrcp.pop %v333
  %v478 = vmul.f32 %v460, %v477
  %v479 = vshra.s32 %v201, 3
  %v480 = vshra.s32 %v202, 3
  %v481 = vshra.s32 %v203, 3
  %v482 = vshra.s32 %v204, 3
  %v483 = vshra.s32 %v205, 3
  %v484 = vshra.s32 %v206, 3
  %v485 = vshra.s32 %v207, 3
  %v486 = vshra.s32 %v208, 3
  %v487 = vand.u32 %v479, 3
  %v488 = vand.u32 %v480, 3
  %v489 = vand.u32 %v481, 3
  %v490 = vand.u32 %v482, 3
  %v491 = vand.u32 %v483, 3
  %v492 = vand.u32 %v484, 3
  %v493 = vand.u32 %v485, 3
  %v494 = vand.u32 %v486, 3
  %v495 = vand.u32 %v201, 7
  %v496 = vand.u32 %v202, 7
  %v497 = vand.u32 %v203, 7
  %v498 = vand.u32 %v204, 7
  %v499 = vand.u32 %v205, 7
  %v500 = vand.u32 %v206, 7
  %v501 = vand.u32 %v207, 7
  %v502 = vand.u32 %v208, 7
  %v503 = vmul.u32 %v211, 32
  %v504 = vmul.u32 %v212, 32
  %v505 = vmul.u32 %v213, 32
  %v506 = vmul.u32 %v214, 32
  %v507 = vmul.u32 %v215, 32
  %v508 = vmul.u32 %v216, 32
  %v509 = vmul.u32 %v217, 32
  %v510 = vmul.u32 %v218, 32
  %v511 = vmul.u32 %v495, 4
  %v512 = vmul.u32 %v496, 4
  %v513 = vmul.u32 %v497, 4
  %v514 = vmul.u32 %v498, 4
  %v515 = vmul.u32 %v499, 4
  %v516 = vmul.u32 %v500, 4
  %v517 = vmul.u32 %v501, 4
  %v518 = vmul.u32 %v502, 4
  %v519 = vadd.s32 %v503, %v511
  %v520 = vadd.s32 %v504, %v512
  %v521 = vadd.s32 %v505, %v513
  %v522 = vadd.s32 %v506, %v514
  %v523 = vadd.s32 %v507, %v515
  %v524 = vadd.s32 %v508, %v516
  %v525 = vadd.s32 %v509, %v517
  %v526 = vadd.s32 %v510, %v518
  %v527 = vadd.s32 %v519, %v487
  %v528 = vadd.s32 %v520, %v488
  %v529 = vadd.s32 %v521, %v489
  %v530 = vadd.s32 %v522, %v490
  %v531 = vadd.s32 %v523, %v491
  %v532 = vadd.s32 %v524, %v492
  %v533 = vadd.s32 %v525, %v493
  %v534 = vadd.s32 %v526, %v494
  %vm535 = vcmp.eq.s32.totalorder %v210, %v527
  %vm536 = vcmp.eq.s32.totalorder %v210, %v528
  %vm537 = vcmp.eq.s32.totalorder %v210, %v529
  %vm538 = vcmp.eq.s32.totalorder %v210, %v530
  %vm539 = vcmp.eq.s32.totalorder %v210, %v531
  %vm540 = vcmp.eq.s32.totalorder %v210, %v532
  %vm541 = vcmp.eq.s32.totalorder %v210, %v533
  %vm542 = vcmp.eq.s32.totalorder %v210, %v534
  %v543 = vsel %vm535, 1.0, 0.0
  %v544 = vsel %vm536, 1.0, 0.0
  %v545 = vsel %vm537, 1.0, 0.0
  %v546 = vsel %vm538, 1.0, 0.0
  %v547 = vsel %vm539, 1.0, 0.0
  %v548 = vsel %vm540, 1.0, 0.0
  %v549 = vsel %vm541, 1.0, 0.0
  %v550 = vsel %vm542, 1.0, 0.0
  %v552 = vsel %vm261, %v543, 0
  %v555 = vsel %vm261, %v544, 0
  %v558 = vsel %vm261, %v545, 0
  %v561 = vsel %vm261, %v546, 0
  %v564 = vsel %vm261, %v547, 0
  %v567 = vsel %vm261, %v548, 0
  %v570 = vsel %vm261, %v549, 0
  %v573 = vsel %vm261, %v550, 0
  %575 = vmatprep.subr.mxu0 0.0
  %576 = vmatpush1.msra.mxu0 0.0
  %577 = vmatprep.subr.mxu0 0.0
  %578 = vmatpush1.msra.mxu0 0.0
  %579 = vmatprep.subr.mxu0 0.0
  %580 = vmatpush1.msra.mxu0 0.0
  %581 = vmatprep.subr.mxu0 0.0
  %582 = vmatpush1.msra.mxu0 0.0
  %583 = vmatprep.subr.mxu0 0.0
  %584 = vmatpush1.msra.mxu0 0.0
  %585 = vmatprep.subr.mxu0 0.0
  %586 = vmatpush1.msra.mxu0 0.0
  %587 = vmatprep.subr.mxu0 0.0
  %588 = vmatpush1.msra.mxu0 0.0
  %589 = vmatprep.subr.mxu0 0.0
  %590 = vmatpush1.msra.mxu0 0.0
  %591 = vmatprep.subr.mxu0 0.0
  %592 = vmatpush1.msra.mxu0 %v478
  %593 = vmatprep.subr.mxu0 0.0
  %594 = vmatpush1.msra.mxu0 %v476
  %595 = vmatprep.subr.mxu0 0.0
  %596 = vmatpush1.msra.mxu0 %v474
  %597 = vmatprep.subr.mxu0 0.0
  %598 = vmatpush1.msra.mxu0 %v472
  %599 = vmatprep.subr.mxu0 0.0
  %600 = vmatpush1.msra.mxu0 %v470
  %601 = vmatprep.subr.mxu0 0.0
  %602 = vmatpush1.msra.mxu0 %v468
  %603 = vmatprep.subr.mxu0 0.0
  %604 = vmatpush1.msra.mxu0 %v466
  %605 = vmatprep.subr.mxu0 0.0
  %606 = vmatpush1.msra.mxu0 %v464
  %607 = vmatprep.subr.mxu0 0.0
  %608 = vmatpush2.msra.mxu0 0.0
  %609 = vmatprep.subr.mxu0 0.0
  %610 = vmatpush2.msra.mxu0 0.0
  %611 = vmatprep.subr.mxu0 0.0
  %612 = vmatpush2.msra.mxu0 0.0
  %613 = vmatprep.subr.mxu0 0.0
  %614 = vmatpush2.msra.mxu0 0.0
  %615 = vmatprep.subr.mxu0 0.0
  %616 = vmatpush2.msra.mxu0 0.0
  %617 = vmatprep.subr.mxu0 0.0
  %618 = vmatpush2.msra.mxu0 0.0
  %619 = vmatprep.subr.mxu0 0.0
  %620 = vmatpush2.msra.mxu0 0.0
  %621 = vmatprep.subr.mxu0 0.0
  %622 = vmatpush2.msra.mxu0 0.0
  %623 = vmatprep.subr.mxu0 0.0
  %624 = vmatpush2.msra.mxu0 0.0
  %625 = vmatprep.subr.mxu0 0.0
  %626 = vmatpush2.msra.mxu0 0.0
  %627 = vmatprep.subr.mxu0 0.0
  %628 = vmatpush2.msra.mxu0 0.0
  %629 = vmatprep.subr.mxu0 0.0
  %630 = vmatpush2.msra.mxu0 0.0
  %631 = vmatprep.subr.mxu0 0.0
  %632 = vmatpush2.msra.mxu0 0.0
  %633 = vmatprep.subr.mxu0 0.0
  %634 = vmatpush2.msra.mxu0 0.0
  %635 = vmatprep.subr.mxu0 0.0
  %636 = vmatpush2.msra.mxu0 0.0
  %637 = vmatprep.subr.mxu0 0.0
  %638 = vmatpush2.msra.mxu0 0.0
  %639 = vmatprep.mubr.f32.mxu0 0.0
  %640 = vmatmul.mubr.f32.gmra.mxu0 %v552
  %v641 = vpop.f32.mrf.mxu0
  %v642 = vadd.f32 0.0, %v641
  %v643 = vpop.f32.mrf.mxu0
  %644 = vmatprep.mubr.f32.mxu0 0.0
  %645 = vmatmul.mubr.f32.gmra.mxu0 %v555
  %v646 = vpop.f32.mrf.mxu0
  %v647 = vadd.f32 0.0, %v646
  %v648 = vpop.f32.mrf.mxu0
  %649 = vmatprep.mubr.f32.mxu0 0.0
  %650 = vmatmul.mubr.f32.gmra.mxu0 %v558
  %v651 = vpop.f32.mrf.mxu0
  %v652 = vadd.f32 0.0, %v651
  %v653 = vpop.f32.mrf.mxu0
  %654 = vmatprep.mubr.f32.mxu0 0.0
  %655 = vmatmul.mubr.f32.gmra.mxu0 %v561
  %v656 = vpop.f32.mrf.mxu0
  %v657 = vadd.f32 0.0, %v656
  %v658 = vpop.f32.mrf.mxu0
  %659 = vmatprep.mubr.f32.mxu0 0.0
  %660 = vmatmul.mubr.f32.gmra.mxu0 %v564
  %v661 = vpop.f32.mrf.mxu0
  %v662 = vadd.f32 0.0, %v661
  %v663 = vpop.f32.mrf.mxu0
  %664 = vmatprep.mubr.f32.mxu0 0.0
  %665 = vmatmul.mubr.f32.gmra.mxu0 %v567
  %v666 = vpop.f32.mrf.mxu0
  %v667 = vadd.f32 0.0, %v666
  %v668 = vpop.f32.mrf.mxu0
  %669 = vmatprep.mubr.f32.mxu0 0.0
  %670 = vmatmul.mubr.f32.gmra.mxu0 %v570
  %v671 = vpop.f32.mrf.mxu0
  %v672 = vadd.f32 0.0, %v671
  %v673 = vpop.f32.mrf.mxu0
  %674 = vmatprep.mubr.f32.mxu0 0.0
  %675 = vmatmul.mubr.f32.gmra.mxu0 %v573
  %v676 = vpop.f32.mrf.mxu0
  %v677 = vadd.f32 0.0, %v676
  %v678 = vpop.f32.mrf.mxu0
  %679 = vdwg.mxu0
  %680 = vst.msk [vmem:[%s3] sm:$0xff] %vm46, %v642
  %681 = vst.msk [vmem:[%s3 + $0x8] sm:$0xff] %vm46, %v647
  %682 = vst.msk [vmem:[%s3 + $0x10] sm:$0xff] %vm46, %v652
  %683 = vst.msk [vmem:[%s3 + $0x18] sm:$0xff] %vm46, %v657
  %684 = vst.msk [vmem:[%s3 + $0x20] sm:$0xff] %vm46, %v662
  %685 = vst.msk [vmem:[%s3 + $0x28] sm:$0xff] %vm46, %v667
  %686 = vst.msk [vmem:[%s3 + $0x30] sm:$0xff] %vm46, %v672
  %687 = vst.msk [vmem:[%s3 + $0x38] sm:$0xff] %vm46, %v677
  // Predicated region
  $region14: #{tpu_custom_call.1} parent=0 // pred_check
    _
  $region15: #{tpu_custom_call.1} parent=0 // pred_check_branch
    %689 = sbr.rel (0) target = $region17
  $region16: #{tpu_custom_call.1} parent=0 // pred_region
    _
  $region17: #{tpu_custom_call.1} parent=0 // pred_fallthru
    _
  // Predicated region
  $region18: #{tpu_custom_call.1} parent=0 // pred_check
    _
  $region19: #{tpu_custom_call.1} parent=0 // pred_check_branch
    %691 = sbr.rel (0) target = $region21
  $region20: #{tpu_custom_call.1} parent=0 // pred_region
    _
  $region21: #{tpu_custom_call.1} parent=0 // pred_fallthru
    _

</llo_original>
